<compile_context>
chip_gen: v7x
topology: tpu7x:2x2x1
jax: 0.10.0
libtpu: 0.0.40
codegen_flags: <defaults>
</compile_context>

<pallas_src>
import jax
import jax.numpy as jnp
from jax.experimental import pallas as pl
from jax.experimental.pallas import tpu as pltpu


def _mlp_kernel(x_ref, w1t_ref, b1_ref, w3t_ref, b3_ref, o_ref):
    # x:   (TB, D) compute dtype     w1t: (D, H) compute dtype   b1: (1, H) f32
    # w3t: (H, O) compute dtype      b3:  (1, O) f32             o:  (TB, O) f32
    x = x_ref[...]

    # fc1: x @ W1^T + b1, ReLU. f32 accumulation on the MXU.
    h = jnp.dot(x, w1t_ref[...], preferred_element_type=jnp.float32) + b1_ref[...]
    h = jnp.maximum(h, 0.0)

    # fc3: h @ W3^T + b3, still f32 accumulation (h re-cast to compute dtype
    # only for the MXU operands).
    out = jnp.dot(h.astype(w3t_ref.dtype), w3t_ref[...],
                  preferred_element_type=jnp.float32) + b3_ref[...]

    o_ref[...] = out.astype(o_ref.dtype)


def linear_net_1hidden_forward(x, w1, b1, w3, b3, inp_dim, *,
                               max_tile=4096, compute_dtype=jnp.bfloat16):
    """Matches LinearNet1Hidden.forward:
       x.view(-1, inp_dim) -> fc1 -> relu -> fc3 -> squeeze."""
    assert max_tile % 128 == 0

    # Glue: flatten like x.view(-1, self.input_dim)
    x2d = x.reshape(-1, inp_dim)
    B, D = x2d.shape
    H = w1.shape[0]
    O = w3.shape[0]
    cdt = jnp.dtype(compute_dtype)

    # One-time layout / dtype prep (outside the kernel, amortized over steps).
    x2d = x2d.astype(cdt)                          # (B, D)  streamed
    w1t = jnp.transpose(w1).astype(cdt)            # (D, H)  resident
    w3t = jnp.transpose(w3).astype(cdt)            # (H, O)  resident
    b1_row = b1.reshape(1, H).astype(jnp.float32)  # (1, H)  resident
    b3_row = b3.reshape(1, O).astype(jnp.float32)  # (1, O)  resident

    # Batch tile: full extent for small B; otherwise a 128-multiple <= max_tile
    # (and <= B, so no block ever exceeds the array). No host-side padding —
    # the ragged last tile is handled by Pallas partial-block masking.
    if B < 128:
        TB = B
    else:
        TB = min(max_tile, (B // 128) * 128)
    grid = (pl.cdiv(B, TB),)

    cost = pl.CostEstimate(
        flops=2 * B * (D * H + H * O),
        bytes_accessed=(B * D * cdt.itemsize + B * O * 4
                        + (D * H + H * O) * cdt.itemsize + (H + O) * 4),
        transcendentals=0,
    )

    out = pl.pallas_call(
        _mlp_kernel,
        out_shape=jax.ShapeDtypeStruct((B, O), jnp.float32),
        grid_spec=pl.GridSpec(
            grid=grid,
            in_specs=[
                # streamed input: double-buffered batch tiles of x
                pl.BlockSpec((TB, D), lambda i: (i, 0),
                             pipeline_mode=pl.Buffered(2)),
                # resident weights / biases (constant index_maps)
                pl.BlockSpec((D, H), lambda i: (0, 0)),
                pl.BlockSpec((1, H), lambda i: (0, 0)),
                pl.BlockSpec((H, O), lambda i: (0, 0)),
                pl.BlockSpec((1, O), lambda i: (0, 0)),
            ],
            # direct (TB, O) store: no wrapper-side transpose needed
            out_specs=pl.BlockSpec((TB, O), lambda i: (i, 0)),
        ),
        compiler_params=pltpu.CompilerParams(
            dimension_semantics=("parallel",),   # batch axis: megacore-shardable
        ),
        cost_estimate=cost,
    )(x2d, w1t, b1_row, w3t, b3_row)

    # Glue: .squeeze() removes ALL size-1 dims, matching torch semantics.
    return jnp.squeeze(out)


def init_params(key, inp_dim, num_hidden, out_dim):
    """Deterministic init mimicking nn.Linear shapes: W (out, in), b (out,)."""
    k1, k2, k3, k4 = jax.random.split(key, 4)
    bound1 = 1.0 / jnp.sqrt(inp_dim)
    bound3 = 1.0 / jnp.sqrt(num_hidden)
    w1 = jax.random.uniform(k1, (num_hidden, inp_dim), jnp.float32, -bound1, bound1)
    b1 = jax.random.uniform(k2, (num_hidden,), jnp.float32, -bound1, bound1)
    w3 = jax.random.uniform(k3, (out_dim, num_hidden), jnp.float32, -bound3, bound3)
    b3 = jax.random.uniform(k4, (out_dim,), jnp.float32, -bound3, bound3)
    return w1, b1, w3, b3


def _reference_f32(x, w1, b1, w3, b3, inp_dim):
    """Pure-f32 module semantics (the PyTorch forward)."""
    x2d = x.reshape(-1, inp_dim)
    h = jnp.maximum(x2d @ w1.T + b1, 0.0)
    return jnp.squeeze(h @ w3.T + b3)


def _reference_emulated(x, w1, b1, w3, b3, inp_dim, compute_dtype):
    """Emulates the kernel's numerics: compute-dtype operands, f32 accumulation."""
    f32 = jnp.float32
    x2d = x.reshape(-1, inp_dim).astype(compute_dtype).astype(f32)
    w1c = w1.astype(compute_dtype).astype(f32)
    w3c = w3.astype(compute_dtype).astype(f32)
    h = jnp.maximum(x2d @ w1c.T + b1.astype(f32), 0.0)
    hc = h.astype(compute_dtype).astype(f32)
    return jnp.squeeze(hc @ w3c.T + b3.astype(f32))


if __name__ == "__main__":
    # Small shapes consistent with the module: batch=8, inp_dim=32, hidden=64, out_dim=4
    inp_dim, num_hidden, out_dim = 32, 64, 4
    batch = 8

    key = jax.random.PRNGKey(0)
    kx, kp = jax.random.split(key)
    x = jax.random.normal(kx, (batch, inp_dim), jnp.float32)
    w1, b1, w3, b3 = init_params(kp, inp_dim, num_hidden, out_dim)

    # --- Check 1: default bf16 stream, f32 accumulation ---
    out = jax.block_until_ready(
        linear_net_1hidden_forward(x, w1, b1, w3, b3, inp_dim))
    ref_emul = _reference_emulated(x, w1, b1, w3, b3, inp_dim, jnp.bfloat16)
    ref_f32 = _reference_f32(x, w1, b1, w3, b3, inp_dim)
    assert out.shape == ref_f32.shape, (out.shape, ref_f32.shape)
    assert jnp.allclose(out, ref_emul, atol=1e-3, rtol=1e-3)
    assert jnp.allclose(out, ref_f32, atol=5e-2, rtol=5e-2)

    # --- Check 2: pure f32 path matches the module semantics tightly ---
    out_f32 = jax.block_until_ready(
        linear_net_1hidden_forward(x, w1, b1, w3, b3, inp_dim,
                                   compute_dtype=jnp.float32))
    assert jnp.allclose(out_f32, ref_f32, atol=1e-4, rtol=1e-4)

    # --- Check 3: non-multiple batch exercises the pad-free multi-step grid
    #     with a ragged (masked) last tile (TB=128, 3 grid steps). ---
    kx2 = jax.random.fold_in(kx, 1)
    x_big = jax.random.normal(kx2, (300, inp_dim), jnp.float32)
    out_big = jax.block_until_ready(
        linear_net_1hidden_forward(x_big, w1, b1, w3, b3, inp_dim, max_tile=128))
    ref_big_emul = _reference_emulated(x_big, w1, b1, w3, b3, inp_dim, jnp.bfloat16)
    ref_big_f32 = _reference_f32(x_big, w1, b1, w3, b3, inp_dim)
    assert out_big.shape == ref_big_f32.shape, (out_big.shape, ref_big_f32.shape)
    assert jnp.allclose(out_big, ref_big_emul, atol=1e-3, rtol=1e-3)
    assert jnp.allclose(out_big, ref_big_f32, atol=5e-2, rtol=5e-2)

    print("KERNEL_OK")
</pallas_src>

<mosaic_0001>
module attributes {stable_mosaic.version = 11 : i64} {
  func.func @_mlp_kernel(%arg0: i32, %arg1: memref<8x32xbf16, #tpu.memory_space<vmem>>, %arg2: memref<32x64xbf16, #tpu.memory_space<vmem>>, %arg3: memref<1x64xf32, #tpu.memory_space<vmem>>, %arg4: memref<64x4xbf16, #tpu.memory_space<vmem>>, %arg5: memref<1x4xf32, #tpu.memory_space<vmem>>, %arg6: memref<8x4xf32, #tpu.memory_space<vmem>>) attributes {dimension_semantics = [#tpu.dimension_semantics<parallel>], iteration_bounds = array<i64: 1>, scalar_prefetch = 0 : i64, scratch_operands = 0 : i64, tpu.core_type = #tpu.core_type<tc>, window_params = [{pipeline_mode = #tpu.pipeline_mode<double_buffered>, transform_indices = @transform_0, window_bounds = array<i64: 8, 32>}, {pipeline_mode = #tpu.pipeline_mode<synchronous>, transform_indices = @transform_1, window_bounds = array<i64: 32, 64>}, {pipeline_mode = #tpu.pipeline_mode<synchronous>, transform_indices = @transform_2, window_bounds = array<i64: 1, 64>}, {pipeline_mode = #tpu.pipeline_mode<synchronous>, transform_indices = @transform_3, window_bounds = array<i64: 64, 4>}, {pipeline_mode = #tpu.pipeline_mode<synchronous>, transform_indices = @transform_4, window_bounds = array<i64: 1, 4>}, {transform_indices = @transform_5, window_bounds = array<i64: 8, 4>}]} {
    %c0 = arith.constant 0 : index
    %c0_0 = arith.constant 0 : index
    %0 = vector.load %arg1[%c0, %c0_0] : memref<8x32xbf16, #tpu.memory_space<vmem>>, vector<8x32xbf16>
    %c0_1 = arith.constant 0 : index
    %c0_2 = arith.constant 0 : index
    %1 = vector.load %arg2[%c0_1, %c0_2] : memref<32x64xbf16, #tpu.memory_space<vmem>>, vector<32x64xbf16>
    %cst = arith.constant dense<0.000000e+00> : vector<8x64xf32>
    %2 = tpu.matmul %0, %1, %cst {dimension_numbers = #tpu.dot_dimension_numbers<[1], [0], [0], [1], [0, 0, 1, 1], [], []>} : vector<8x32xbf16>, vector<32x64xbf16>, vector<8x64xf32> -> vector<8x64xf32>
    %c0_3 = arith.constant 0 : index
    %c0_4 = arith.constant 0 : index
    %3 = vector.load %arg3[%c0_3, %c0_4] : memref<1x64xf32, #tpu.memory_space<vmem>>, vector<1x64xf32>
    %4 = vector.broadcast %3 : vector<1x64xf32> to vector<8x64xf32>
    %5 = arith.addf %2, %4 : vector<8x64xf32>
    %cst_5 = arith.constant 0.000000e+00 : f32
    %6 = vector.broadcast %cst_5 : f32 to vector<8x64xf32>
    %7 = arith.maximumf %5, %6 : vector<8x64xf32>
    %8 = arith.truncf %7 : vector<8x64xf32> to vector<8x64xbf16>
    %c0_6 = arith.constant 0 : index
    %c0_7 = arith.constant 0 : index
    %9 = vector.load %arg4[%c0_6, %c0_7] : memref<64x4xbf16, #tpu.memory_space<vmem>>, vector<64x4xbf16>
    %cst_8 = arith.constant dense<0.000000e+00> : vector<8x4xf32>
    %10 = tpu.matmul %8, %9, %cst_8 {dimension_numbers = #tpu.dot_dimension_numbers<[1], [0], [0], [1], [0, 0, 1, 1], [], []>} : vector<8x64xbf16>, vector<64x4xbf16>, vector<8x4xf32> -> vector<8x4xf32>
    %c0_9 = arith.constant 0 : index
    %c0_10 = arith.constant 0 : index
    %11 = vector.load %arg5[%c0_9, %c0_10] : memref<1x4xf32, #tpu.memory_space<vmem>>, vector<1x4xf32>
    %12 = vector.broadcast %11 : vector<1x4xf32> to vector<8x4xf32>
    %13 = arith.addf %10, %12 : vector<8x4xf32>
    %c0_11 = arith.constant 0 : index
    %c0_12 = arith.constant 0 : index
    %14 = vector.load %arg6[%c0_11, %c0_12] : memref<8x4xf32, #tpu.memory_space<vmem>>, vector<8x4xf32>
    tpu.vector_store %arg6[%c0_11, %c0_12], %13 {strides = array<i32>} : memref<8x4xf32, #tpu.memory_space<vmem>>, vector<8x4xf32>,
    return
  }
  func.func @transform_0(%arg0: i32) -> (i32, i32) {
    %c0_i32 = arith.constant 0 : i32
    %c0_i32_0 = arith.constant 0 : i32
    return %arg0, %c0_i32 : i32, i32
  }
  func.func @transform_1(%arg0: i32) -> (i32, i32) {
    %c0_i32 = arith.constant 0 : i32
    %c0_i32_0 = arith.constant 0 : i32
    %c0_i32_1 = arith.constant 0 : i32
    return %c0_i32, %c0_i32_0 : i32, i32
  }
  func.func @transform_2(%arg0: i32) -> (i32, i32) {
    %c0_i32 = arith.constant 0 : i32
    %c0_i32_0 = arith.constant 0 : i32
    %c0_i32_1 = arith.constant 0 : i32
    return %c0_i32, %c0_i32_0 : i32, i32
  }
  func.func @transform_3(%arg0: i32) -> (i32, i32) {
    %c0_i32 = arith.constant 0 : i32
    %c0_i32_0 = arith.constant 0 : i32
    %c0_i32_1 = arith.constant 0 : i32
    return %c0_i32, %c0_i32_0 : i32, i32
  }
  func.func @transform_4(%arg0: i32) -> (i32, i32) {
    %c0_i32 = arith.constant 0 : i32
    %c0_i32_0 = arith.constant 0 : i32
    %c0_i32_1 = arith.constant 0 : i32
    return %c0_i32, %c0_i32_0 : i32, i32
  }
  func.func @transform_5(%arg0: i32) -> (i32, i32) {
    %c0_i32 = arith.constant 0 : i32
    %c0_i32_0 = arith.constant 0 : i32
    return %arg0, %c0_i32 : i32, i32
  }
}

</mosaic_0001>

<llo_original>
// kernel: tpu_custom_call.1
$region0: #{tpu_custom_call.1}
  #allocation0 [shape = 'u32[]', space=smem, size = 0x4, offset = 0x4, fixed_abs, tag = 'smem constant byte address 0x4 - core index']
  #allocation1 [shape = 'u32[144,128]{1,0:T(1,128)}', space=vmem, size = 0x12000, scoped, tag = 'internal scratch']
  %s0 = inlined_call_operand.vmem [shape: bf16[8,32], index: 0, kind: input, shape index: {}]
  %s1 = inlined_call_operand.vmem [shape: bf16[32,64], index: 1, kind: input, shape index: {}]
  %s2 = inlined_call_operand.vmem [shape: f32[1,64], index: 2, kind: input, shape index: {}]
  %s3 = inlined_call_operand.vmem [shape: bf16[64,4], index: 3, kind: input, shape index: {}]
  %s4 = inlined_call_operand.vmem [shape: f32[1,4], index: 4, kind: input, shape index: {}]
  %s5 = inlined_call_operand.vmem [shape: f32[8,4], index: 5, kind: output, shape index: {}]
  %s6 = sld [smem:[#allocation0]]
  $region30: #{tpu_custom_call.1} parent=0
    _
  %s8 = ssub.s32 1, %s6
  %s9 = scalar_select 0, %s8, %s6
  // Predicated region
  $region2: #{tpu_custom_call.1} parent=0 // pred_check
    _
  $region3: #{tpu_custom_call.1} parent=0 // pred_check_branch
    %11 = sbr.rel (0) target = $region5
  $region4: #{tpu_custom_call.1} parent=0 // pred_region
    _
  $region5: #{tpu_custom_call.1} parent=0 // pred_fallthru
    _
  // Predicated region
  $region6: #{tpu_custom_call.1} parent=0 // pred_check
    _
  $region7: #{tpu_custom_call.1} parent=0 // pred_check_branch
    %13 = sbr.rel (0) target = $region9
  $region8: #{tpu_custom_call.1} parent=0 // pred_region
    _
  $region9: #{tpu_custom_call.1} parent=0 // pred_fallthru
    _
  // Predicated region
  $region10: #{tpu_custom_call.1} parent=0 // pred_check
    _
  $region11: #{tpu_custom_call.1} parent=0 // pred_check_branch
    %15 = sbr.rel (0) target = $region13
  $region12: #{tpu_custom_call.1} parent=0 // pred_region
    _
  $region13: #{tpu_custom_call.1} parent=0 // pred_fallthru
    _
  // Predicated region
  $region14: #{tpu_custom_call.1} parent=0 // pred_check
    _
  $region15: #{tpu_custom_call.1} parent=0 // pred_check_branch
    %17 = sbr.rel (0) target = $region17
  $region16: #{tpu_custom_call.1} parent=0 // pred_region
    _
  $region17: #{tpu_custom_call.1} parent=0 // pred_fallthru
    _
  // Predicated region
  $region18: #{tpu_custom_call.1} parent=0 // pred_check
    _
  $region19: #{tpu_custom_call.1} parent=0 // pred_check_branch
    %19 = sbr.rel (0) target = $region21
  $region20: #{tpu_custom_call.1} parent=0 // pred_region
    _
  $region21: #{tpu_custom_call.1} parent=0 // pred_fallthru
    _
  %v21 = vld [vmem:[%s0] sm:$0xf]
  %v22 = vld [vmem:[%s1] sm:$0xf]
  %v23 = vld [vmem:[%s1 + $0x4] sm:$0xf]
  %v24 = vld [vmem:[%s1 + $0x8] sm:$0xf]
  %v25 = vld [vmem:[%s1 + $0xc] sm:$0xf]
  %v26 = vld [vmem:[%s2] sm:$0x1]
  %v28 = vlaneseq
  %v29 = vshrl.u32 %v28, 7
  %v30 = vsub.s32 0, %v29
  %v31 = vrot.slane %v26, %v30
  %v37 = vunpack.c.l.b16 %v22
  %v38 = vunpack.c.l.b16 %v23
  %v39 = vunpack.c.l.b16 %v24
  %v40 = vunpack.c.l.b16 %v25
  %v41 = vpack.c.b16 %v38, %v37
  %v42 = vpack.c.b16 %v40, %v39
  %vm45 = vcmask 261120
  %v47 = vsel %vm45, %v21, 0
  %49 = vmatprep.subr.bf16.mxu0 0
  %50 = vmatpush1.bf16.msra.mxu0 %v41
  %51 = vmatprep.subr.bf16.mxu0 0
  %52 = vmatpush1.bf16.msra.mxu0 %v42
  %53 = vmatprep.subr.bf16.mxu0 0
  %54 = vmatpush1.bf16.msra.mxu0 0
  %55 = vmatprep.subr.bf16.mxu0 0
  %56 = vmatpush1.bf16.msra.mxu0 0
  %57 = vmatprep.subr.bf16.mxu0 0
  %58 = vmatpush1.bf16.msra.mxu0 0
  %59 = vmatprep.subr.bf16.mxu0 0
  %60 = vmatpush1.bf16.msra.mxu0 0
  %61 = vmatprep.subr.bf16.mxu0 0
  %62 = vmatpush1.bf16.msra.mxu0 0
  %63 = vmatprep.subr.bf16.mxu0 0
  %64 = vmatpush1.bf16.msra.mxu0 0
  %65 = vmatprep.subr.bf16.mxu0 0
  %66 = vmatpush1.bf16.msra.mxu0 0
  %67 = vmatprep.subr.bf16.mxu0 0
  %68 = vmatpush1.bf16.msra.mxu0 0
  %69 = vmatprep.subr.bf16.mxu0 0
  %70 = vmatpush1.bf16.msra.mxu0 0
  %71 = vmatprep.subr.bf16.mxu0 0
  %72 = vmatpush1.bf16.msra.mxu0 0
  %73 = vmatprep.subr.bf16.mxu0 0
  %74 = vmatpush1.bf16.msra.mxu0 0
  %75 = vmatprep.subr.bf16.mxu0 0
  %76 = vmatpush1.bf16.msra.mxu0 0
  %77 = vmatprep.subr.bf16.mxu0 0
  %78 = vmatpush1.bf16.msra.mxu0 0
  %79 = vmatprep.subr.bf16.mxu0 0
  %80 = vmatpush1.bf16.msra.mxu0 0
  %81 = vmatprep.mubr.bf16.mxu0 0
  %82 = vmatmul.mubr.bf16.gmra.mrb[0].mxu0 %v47
  %v83 = vpop.f32.mrb[0].mxu0
  %v84 = vadd.f32 %v31, %v83
  %v85 = vpop.f32.mrb[0].mxu0
  %v86 = vpop.f32.mrb[0].mxu0
  %v87 = vpop.f32.mrb[0].mxu0
  %88 = vdwg.mxu0
  %v89 = vmax.f32 %v84, 0.0
  %v90 = vpack.c.bf16 %v89, %v89
  %v91 = vld [vmem:[%s3] sm:$0xf]
  %v92 = vld [vmem:[%s3 + $0x4] sm:$0xf]
  %v93 = vld [vmem:[%s3 + $0x8] sm:$0xf]
  %v94 = vld [vmem:[%s3 + $0xc] sm:$0xf]
  %v95 = vld [vmem:[%s3 + $0x10] sm:$0xf]
  %v96 = vld [vmem:[%s3 + $0x14] sm:$0xf]
  %v97 = vld [vmem:[%s3 + $0x18] sm:$0xf]
  %v98 = vld [vmem:[%s3 + $0x1c] sm:$0xf]
  %v99 = vld [vmem:[%s4] sm:$0x1]
  %v101 = vlaneseq
  %v102 = vshrl.u32 %v101, 7
  %v103 = vsub.s32 0, %v102
  %v104 = vrot.slane %v99, %v103
  %v114 = vunpack.c.l.b16 %v91
  %v115 = vunpack.c.l.b16 %v92
  %v116 = vunpack.c.l.b16 %v93
  %v117 = vunpack.c.l.b16 %v94
  %v118 = vunpack.c.l.b16 %v95
  %v119 = vunpack.c.l.b16 %v96
  %v120 = vunpack.c.l.b16 %v97
  %v121 = vunpack.c.l.b16 %v98
  %v122 = vpack.c.b16 %v115, %v114
  %v123 = vpack.c.b16 %v117, %v116
  %v124 = vpack.c.b16 %v119, %v118
  %v125 = vpack.c.b16 %v121, %v120
  %vm130 = vcmask 523264
  %v132 = vsel %vm130, %v90, 0
  %134 = vmatprep.subr.bf16.mxu0 0
  %135 = vmatpush1.bf16.msra.mxu0 %v122
  %136 = vmatprep.subr.bf16.mxu0 0
  %137 = vmatpush1.bf16.msra.mxu0 %v123
  %138 = vmatprep.subr.bf16.mxu0 0
  %139 = vmatpush1.bf16.msra.mxu0 %v124
  %140 = vmatprep.subr.bf16.mxu0 0
  %141 = vmatpush1.bf16.msra.mxu0 %v125
  %142 = vmatprep.subr.bf16.mxu0 0
  %143 = vmatpush1.bf16.msra.mxu0 0
  %144 = vmatprep.subr.bf16.mxu0 0
  %145 = vmatpush1.bf16.msra.mxu0 0
  %146 = vmatprep.subr.bf16.mxu0 0
  %147 = vmatpush1.bf16.msra.mxu0 0
  %148 = vmatprep.subr.bf16.mxu0 0
  %149 = vmatpush1.bf16.msra.mxu0 0
  %150 = vmatprep.subr.bf16.mxu0 0
  %151 = vmatpush1.bf16.msra.mxu0 0
  %152 = vmatprep.subr.bf16.mxu0 0
  %153 = vmatpush1.bf16.msra.mxu0 0
  %154 = vmatprep.subr.bf16.mxu0 0
  %155 = vmatpush1.bf16.msra.mxu0 0
  %156 = vmatprep.subr.bf16.mxu0 0
  %157 = vmatpush1.bf16.msra.mxu0 0
  %158 = vmatprep.subr.bf16.mxu0 0
  %159 = vmatpush1.bf16.msra.mxu0 0
  %160 = vmatprep.subr.bf16.mxu0 0
  %161 = vmatpush1.bf16.msra.mxu0 0
  %162 = vmatprep.subr.bf16.mxu0 0
  %163 = vmatpush1.bf16.msra.mxu0 0
  %164 = vmatprep.subr.bf16.mxu0 0
  %165 = vmatpush1.bf16.msra.mxu0 0
  %166 = vmatprep.mubr.bf16.mxu0 0
  %167 = vmatmul.mubr.bf16.gmra.mrb[0].mxu0 %v132
  %v168 = vpop.f32.mrb[0].mxu0
  %v169 = vadd.f32 %v104, %v168
  %v170 = vpop.f32.mrb[0].mxu0
  %v171 = vpop.f32.mrb[0].mxu0
  %v172 = vpop.f32.mrb[0].mxu0
  %173 = vdwg.mxu0
  %vm174 = vcmask 31744
  %175 = vst.msk [vmem:[%s5] sm:$0xff] %vm174, %v169
  // Predicated region
  $region22: #{tpu_custom_call.1} parent=0 // pred_check
    _
  $region23: #{tpu_custom_call.1} parent=0 // pred_check_branch
    %177 = sbr.rel (0) target = $region25
  $region24: #{tpu_custom_call.1} parent=0 // pred_region
    _
  $region25: #{tpu_custom_call.1} parent=0 // pred_fallthru
    _
  // Predicated region
  $region26: #{tpu_custom_call.1} parent=0 // pred_check
    _
  $region27: #{tpu_custom_call.1} parent=0 // pred_check_branch
    %179 = sbr.rel (0) target = $region29
  $region28: #{tpu_custom_call.1} parent=0 // pred_region
    _
  $region29: #{tpu_custom_call.1} parent=0 // pred_fallthru
    _

</llo_original>
